<compile_context>
chip_gen: v7x
topology: tpu7x:2x2x1
jax: 0.10.0
libtpu: 0.0.40
codegen_flags: <defaults>
</compile_context>

<pallas_src>
import functools
import math

import jax
import jax.numpy as jnp
from jax.experimental import pallas as pl
from jax.experimental.pallas import tpu as pltpu


LOD_MEAN_IN = 200
LOD_VAR_IN = 300
HIDDEN = 64
LAST_HIDDEN = 8
OUT_DIM = 8

MAX_BATCH_TILE = 1024
MIN_BATCH_TILE = 8


def _cdiv(a, b):
    return -(-a // b)


def _round_up(a, b):
    return _cdiv(a, b) * b


def _elup1(x):
    # elup1(x) = exp(x) if x < 0 else x + 1.
    # exp(min(x, 0)) keeps the discarded branch finite for large positive x.
    return jnp.where(x < 0.0, jnp.exp(jnp.minimum(x, 0.0)), x + 1.0)


def _num_tensorcores():
    """Best-effort core count per chip: only v7x has 2 TensorCores."""
    try:
        kind = jax.devices()[0].device_kind.lower()
        if "v7" in kind:
            return 2
    except Exception:
        pass
    return 1


def _choose_batch_tile(batch, num_cores):
    """Largest power-of-two tile <= MAX_BATCH_TILE that (a) still gives at
    least `num_cores` grid steps when the batch allows it, (b) is not larger
    than the 8-row-padded batch, and (c) on dual-core chips prefers an even
    number of grid steps."""
    tile = MAX_BATCH_TILE
    while tile > MIN_BATCH_TILE and _cdiv(batch, tile) < num_cores:
        tile //= 2
    tile = min(tile, _round_up(batch, MIN_BATCH_TILE))
    if num_cores == 2:
        n = _cdiv(batch, tile)
        if n > 1 and n % 2 == 1 and tile // 2 >= MIN_BATCH_TILE \
                and _cdiv(batch, tile // 2) % 2 == 0:
            tile //= 2
    return max(MIN_BATCH_TILE, tile)


def _decoder_kernel(
    # batch-tiled activation inputs (caller dtype, cast in-kernel)
    lm_ref, lc_ref,
    # resident fused parameters
    w1m_ref,   # (200, 128)   [W_m1 | 0]
    w1v_ref,   # (300, 128)   [0 | W_v1]
    b1_ref,    # (1, 128)     [b_m1 , b_v1]
    w2_ref,    # (128, 128)   blockdiag(W_m2, W_v2)
    b2_ref,    # (1, 128)     [b_m2 , b_v2]
    w3o_ref,   # (128, 2*out) blockdiag(W_m3@W_mo, W_v3@W_vo)
    b3o_ref,   # (1, 2*out)   [b_m3@W_mo+b_mo , b_v3@W_vo+b_vo]
    # outputs
    mean_ref, var_ref,
):
    f32 = jnp.float32
    cdt = w2_ref.dtype                      # matmul operand dtype (bf16 or f32)
    out_dim = mean_ref.shape[1]

    # Cast the streamed f32 activations to the operand dtype on the VPU
    # (free slot); HBM only ever carries the caller's arrays once.
    lm = lm_ref[...].astype(cdt)
    lc = lc_ref[...].astype(cdt)

    # Layer 1: both branches fused along the output (lane) axis via
    # zero-padded weights -> (tile, 128) without any lane concat.
    h = jnp.tanh(
        jnp.dot(lm, w1m_ref[...], preferred_element_type=f32)
        + jnp.dot(lc, w1v_ref[...], preferred_element_type=f32)
        + b1_ref[...])

    # Layer 2: block-diagonal (128, 128).
    h = jnp.tanh(
        jnp.dot(h.astype(cdt), w2_ref[...], preferred_element_type=f32)
        + b2_ref[...])

    # Fused layer-3 + output layer: block-diagonal (128, 2*out_dim).
    z = jnp.dot(h.astype(cdt), w3o_ref[...], preferred_element_type=f32) \
        + b3o_ref[...]

    mean_ref[...] = z[:, :out_dim].astype(mean_ref.dtype)
    var_ref[...] = _elup1(z[:, out_dim:]).astype(var_ref.dtype)


@functools.partial(jax.jit, static_argnames=("batch_tile", "compute_dtype"))
def split_diag_gaussian_decoder(latent_mean, latent_cov, params,
                                batch_tile=None,
                                compute_dtype=jnp.bfloat16):
    f32 = jnp.float32
    B = latent_mean.shape[0]
    out_dim = params["wmo"].shape[1]

    if batch_tile is None:
        batch_tile = _choose_batch_tile(B, _num_tensorcores())
    batch_tile = max(MIN_BATCH_TILE, _round_up(int(batch_tile), 8))
    n_tiles = pl.cdiv(B, batch_tile)        # ragged last block handled by Pallas

    # --- parameter fusion (tiny: ~0.2 MB; callers may pre-pack if desired) ---
    # Algebraic fusion of each branch's last two linear layers (done in f32).
    wm3o = params["wm3"].astype(f32) @ params["wmo"].astype(f32)
    bm3o = params["bm3"].astype(f32) @ params["wmo"].astype(f32) + params["bmo"].astype(f32)
    wv3o = params["wv3"].astype(f32) @ params["wvo"].astype(f32)
    bv3o = params["bv3"].astype(f32) @ params["wvo"].astype(f32) + params["bvo"].astype(f32)

    # Block-diagonal packing of the two branches into one 128-wide network.
    zH = jnp.zeros((HIDDEN, HIDDEN), f32)
    zO = jnp.zeros((HIDDEN, out_dim), f32)
    w1m = jnp.concatenate([params["wm1"].astype(f32),
                           jnp.zeros((LOD_MEAN_IN, HIDDEN), f32)], axis=1)
    w1v = jnp.concatenate([jnp.zeros((LOD_VAR_IN, HIDDEN), f32),
                           params["wv1"].astype(f32)], axis=1)
    b1 = jnp.concatenate([params["bm1"].astype(f32),
                          params["bv1"].astype(f32)], axis=1)
    w2 = jnp.concatenate(
        [jnp.concatenate([params["wm2"].astype(f32), zH], axis=1),
         jnp.concatenate([zH, params["wv2"].astype(f32)], axis=1)], axis=0)
    b2 = jnp.concatenate([params["bm2"].astype(f32),
                          params["bv2"].astype(f32)], axis=1)
    w3o = jnp.concatenate(
        [jnp.concatenate([wm3o, zO], axis=1),
         jnp.concatenate([zO, wv3o], axis=1)], axis=0)
    b3o = jnp.concatenate([bm3o, bv3o], axis=1)

    # Weights in compute_dtype (MXU operands); biases stay f32 (f32 accumulate).
    param_vals = [
        w1m.astype(compute_dtype), w1v.astype(compute_dtype), b1,
        w2.astype(compute_dtype), b2,
        w3o.astype(compute_dtype), b3o,
    ]

    in_specs = [
        pl.BlockSpec((batch_tile, LOD_MEAN_IN), lambda i: (i, 0)),
        pl.BlockSpec((batch_tile, LOD_VAR_IN), lambda i: (i, 0)),
    ] + [pl.BlockSpec(p.shape, lambda i: (0, 0)) for p in param_vals]

    out_shape = (jax.ShapeDtypeStruct((B, out_dim), f32),
                 jax.ShapeDtypeStruct((B, out_dim), f32))
    out_specs = [pl.BlockSpec((batch_tile, out_dim), lambda i: (i, 0)),
                 pl.BlockSpec((batch_tile, out_dim), lambda i: (i, 0))]

    # VMEM estimate: double-buffered streamed tiles (at their *true* dtypes)
    # plus resident params.  Only needs an explicit limit for very large tiles
    # (relevant to v5e's 16 MiB scoped default).
    in_itemsize = jnp.dtype(latent_mean.dtype).itemsize
    step_bytes = batch_tile * (LOD_MEAN_IN + LOD_VAR_IN) * in_itemsize \
        + batch_tile * 2 * out_dim * 4
    param_bytes = sum(math.prod(p.shape) * jnp.dtype(p.dtype).itemsize
                      for p in param_vals)
    vmem_est = 2 * step_bytes + param_bytes
    cp_kwargs = dict(dimension_semantics=("parallel",))
    if vmem_est > 12 * 1024 * 1024:
        cp_kwargs["vmem_limit_bytes"] = int(min(vmem_est + (4 << 20),
                                                100 * 1024 * 1024))

    mean, var = pl.pallas_call(
        _decoder_kernel,
        out_shape=out_shape,
        grid_spec=pltpu.PrefetchScalarGridSpec(
            num_scalar_prefetch=0,
            grid=(n_tiles,),
            in_specs=in_specs,
            out_specs=out_specs,
        ),
        compiler_params=pltpu.CompilerParams(**cp_kwargs),
    )(latent_mean, latent_cov, *param_vals)

    return mean, var


def init_params(key, out_dim=OUT_DIM):
    """Deterministic synthetic parameter init (shapes match the PyTorch module)."""
    def linear(key, fan_in, fan_out):
        kw, kb = jax.random.split(key)
        bound = 1.0 / jnp.sqrt(fan_in)
        w = jax.random.uniform(kw, (fan_in, fan_out), jnp.float32, -bound, bound)
        b = jax.random.uniform(kb, (1, fan_out), jnp.float32, -bound, bound)
        return w, b

    keys = jax.random.split(key, 8)
    p = {}
    p["wm1"], p["bm1"] = linear(keys[0], LOD_MEAN_IN, HIDDEN)
    p["wm2"], p["bm2"] = linear(keys[1], HIDDEN, HIDDEN)
    p["wm3"], p["bm3"] = linear(keys[2], HIDDEN, LAST_HIDDEN)
    p["wmo"], p["bmo"] = linear(keys[3], LAST_HIDDEN, out_dim)
    p["wv1"], p["bv1"] = linear(keys[4], LOD_VAR_IN, HIDDEN)
    p["wv2"], p["bv2"] = linear(keys[5], HIDDEN, HIDDEN)
    p["wv3"], p["bv3"] = linear(keys[6], HIDDEN, LAST_HIDDEN)
    p["wvo"], p["bvo"] = linear(keys[7], LAST_HIDDEN, out_dim)
    return p


def reference_forward(latent_mean, latent_cov, params):
    """Plain-JAX reference matching the PyTorch forward semantics (unfused)."""
    h = latent_mean
    h = jnp.tanh(h @ params["wm1"] + params["bm1"])
    h = jnp.tanh(h @ params["wm2"] + params["bm2"])
    h = h @ params["wm3"] + params["bm3"]
    mean = h @ params["wmo"] + params["bmo"]

    g = latent_cov
    g = jnp.tanh(g @ params["wv1"] + params["bv1"])
    g = jnp.tanh(g @ params["wv2"] + params["bv2"])
    g = g @ params["wv3"] + params["bv3"]
    log_var = g @ params["wvo"] + params["bvo"]
    var = jnp.where(log_var < 0.0, jnp.exp(log_var), log_var + 1.0)
    return mean, var


if __name__ == "__main__":
    key = jax.random.PRNGKey(0)
    k_params, k_mean, k_cov = jax.random.split(key, 3)

    # B=20 is not a multiple of 8 -> exercises the ragged last block
    # (padded read / masked write) without any wrapper-side jnp.pad.
    B = 20
    params = init_params(k_params, out_dim=OUT_DIM)
    latent_mean = jax.random.normal(k_mean, (B, LOD_MEAN_IN), jnp.float32)
    latent_cov = jax.random.normal(k_cov, (B, LOD_VAR_IN), jnp.float32)

    ref_mean, ref_var = reference_forward(latent_mean, latent_cov, params)

    # Exact-semantics path: f32 operands everywhere, auto-chosen (single) tile.
    mean32, var32 = split_diag_gaussian_decoder(
        latent_mean, latent_cov, params, compute_dtype=jnp.float32)
    mean32, var32 = jax.block_until_ready((mean32, var32))
    assert mean32.shape == (B, OUT_DIM) and var32.shape == (B, OUT_DIM)
    assert jnp.allclose(mean32, ref_mean, atol=1e-4, rtol=1e-4)
    assert jnp.allclose(var32, ref_var, atol=1e-4, rtol=1e-4)

    # Default fast path (bf16 matmul operands, f32 accumulation); explicit
    # small tile -> 2-step grid with a ragged second block.
    mean_bf, var_bf = split_diag_gaussian_decoder(
        latent_mean, latent_cov, params, batch_tile=16)
    mean_bf, var_bf = jax.block_until_ready((mean_bf, var_bf))
    assert mean_bf.shape == (B, OUT_DIM) and var_bf.shape == (B, OUT_DIM)
    assert jnp.allclose(mean_bf, ref_mean, atol=5e-2, rtol=5e-2)
    assert jnp.allclose(var_bf, ref_var, atol=5e-2, rtol=5e-2)

    assert bool(jnp.all(var32 > 0.0)) and bool(jnp.all(var_bf > 0.0))

    print("KERNEL_OK")
</pallas_src>

<mosaic_0001>
module attributes {stable_mosaic.version = 11 : i64} {
  func.func @_decoder_kernel(%arg0: i32, %arg1: memref<24x200xf32, #tpu.memory_space<vmem>>, %arg2: memref<24x300xf32, #tpu.memory_space<vmem>>, %arg3: memref<200x128xf32, #tpu.memory_space<vmem>>, %arg4: memref<300x128xf32, #tpu.memory_space<vmem>>, %arg5: memref<1x128xf32, #tpu.memory_space<vmem>>, %arg6: memref<128x128xf32, #tpu.memory_space<vmem>>, %arg7: memref<1x128xf32, #tpu.memory_space<vmem>>, %arg8: memref<128x16xf32, #tpu.memory_space<vmem>>, %arg9: memref<1x16xf32, #tpu.memory_space<vmem>>, %arg10: memref<24x8xf32, #tpu.memory_space<vmem>>, %arg11: memref<24x8xf32, #tpu.memory_space<vmem>>) attributes {dimension_semantics = [#tpu.dimension_semantics<parallel>], iteration_bounds = array<i64: 1>, scalar_prefetch = 0 : i64, scratch_operands = 0 : i64, tpu.core_type = #tpu.core_type<tc>, window_params = [{transform_indices = @transform_0, window_bounds = array<i64: 24, 200>}, {transform_indices = @transform_1, window_bounds = array<i64: 24, 300>}, {pipeline_mode = #tpu.pipeline_mode<synchronous>, transform_indices = @transform_2, window_bounds = array<i64: 200, 128>}, {pipeline_mode = #tpu.pipeline_mode<synchronous>, transform_indices = @transform_3, window_bounds = array<i64: 300, 128>}, {pipeline_mode = #tpu.pipeline_mode<synchronous>, transform_indices = @transform_4, window_bounds = array<i64: 1, 128>}, {pipeline_mode = #tpu.pipeline_mode<synchronous>, transform_indices = @transform_5, window_bounds = array<i64: 128, 128>}, {pipeline_mode = #tpu.pipeline_mode<synchronous>, transform_indices = @transform_6, window_bounds = array<i64: 1, 128>}, {pipeline_mode = #tpu.pipeline_mode<synchronous>, transform_indices = @transform_7, window_bounds = array<i64: 128, 16>}, {pipeline_mode = #tpu.pipeline_mode<synchronous>, transform_indices = @transform_8, window_bounds = array<i64: 1, 16>}, {transform_indices = @transform_9, window_bounds = array<i64: 24, 8>}, {transform_indices = @transform_10, window_bounds = array<i64: 24, 8>}]} {
    %c0 = arith.constant 0 : index
    %c0_0 = arith.constant 0 : index
    %0 = vector.load %arg1[%c0, %c0_0] : memref<24x200xf32, #tpu.memory_space<vmem>>, vector<24x200xf32>
    %c0_1 = arith.constant 0 : index
    %c0_2 = arith.constant 0 : index
    %1 = vector.load %arg2[%c0_1, %c0_2] : memref<24x300xf32, #tpu.memory_space<vmem>>, vector<24x300xf32>
    %c0_3 = arith.constant 0 : index
    %c0_4 = arith.constant 0 : index
    %2 = vector.load %arg3[%c0_3, %c0_4] : memref<200x128xf32, #tpu.memory_space<vmem>>, vector<200x128xf32>
    %cst = arith.constant dense<0.000000e+00> : vector<24x128xf32>
    %3 = tpu.matmul %0, %2, %cst {dimension_numbers = #tpu.dot_dimension_numbers<[1], [0], [0], [1], [0, 0, 1, 1], [], []>} : vector<24x200xf32>, vector<200x128xf32>, vector<24x128xf32> -> vector<24x128xf32>
    %c0_5 = arith.constant 0 : index
    %c0_6 = arith.constant 0 : index
    %4 = vector.load %arg4[%c0_5, %c0_6] : memref<300x128xf32, #tpu.memory_space<vmem>>, vector<300x128xf32>
    %cst_7 = arith.constant dense<0.000000e+00> : vector<24x128xf32>
    %5 = tpu.matmul %1, %4, %cst_7 {dimension_numbers = #tpu.dot_dimension_numbers<[1], [0], [0], [1], [0, 0, 1, 1], [], []>} : vector<24x300xf32>, vector<300x128xf32>, vector<24x128xf32> -> vector<24x128xf32>
    %6 = arith.addf %3, %5 : vector<24x128xf32>
    %c0_8 = arith.constant 0 : index
    %c0_9 = arith.constant 0 : index
    %7 = vector.load %arg5[%c0_8, %c0_9] : memref<1x128xf32, #tpu.memory_space<vmem>>, vector<1x128xf32>
    %8 = vector.broadcast %7 : vector<1x128xf32> to vector<24x128xf32>
    %9 = arith.addf %6, %8 : vector<24x128xf32>
    %10 = math.tanh %9 : vector<24x128xf32>
    %c0_10 = arith.constant 0 : index
    %c0_11 = arith.constant 0 : index
    %11 = vector.load %arg6[%c0_10, %c0_11] : memref<128x128xf32, #tpu.memory_space<vmem>>, vector<128x128xf32>
    %cst_12 = arith.constant dense<0.000000e+00> : vector<24x128xf32>
    %12 = tpu.matmul %10, %11, %cst_12 {dimension_numbers = #tpu.dot_dimension_numbers<[1], [0], [0], [1], [0, 0, 1, 1], [], []>} : vector<24x128xf32>, vector<128x128xf32>, vector<24x128xf32> -> vector<24x128xf32>
    %c0_13 = arith.constant 0 : index
    %c0_14 = arith.constant 0 : index
    %13 = vector.load %arg7[%c0_13, %c0_14] : memref<1x128xf32, #tpu.memory_space<vmem>>, vector<1x128xf32>
    %14 = vector.broadcast %13 : vector<1x128xf32> to vector<24x128xf32>
    %15 = arith.addf %12, %14 : vector<24x128xf32>
    %16 = math.tanh %15 : vector<24x128xf32>
    %c0_15 = arith.constant 0 : index
    %c0_16 = arith.constant 0 : index
    %17 = vector.load %arg8[%c0_15, %c0_16] : memref<128x16xf32, #tpu.memory_space<vmem>>, vector<128x16xf32>
    %cst_17 = arith.constant dense<0.000000e+00> : vector<24x16xf32>
    %18 = tpu.matmul %16, %17, %cst_17 {dimension_numbers = #tpu.dot_dimension_numbers<[1], [0], [0], [1], [0, 0, 1, 1], [], []>} : vector<24x128xf32>, vector<128x16xf32>, vector<24x16xf32> -> vector<24x16xf32>
    %c0_18 = arith.constant 0 : index
    %c0_19 = arith.constant 0 : index
    %19 = vector.load %arg9[%c0_18, %c0_19] : memref<1x16xf32, #tpu.memory_space<vmem>>, vector<1x16xf32>
    %20 = vector.broadcast %19 : vector<1x16xf32> to vector<24x16xf32>
    %21 = arith.addf %18, %20 : vector<24x16xf32>
    %22 = vector.extract_strided_slice %21 {offsets = [0, 0], sizes = [24, 8], strides = [1, 1]} : vector<24x16xf32> to vector<24x8xf32>
    %c0_20 = arith.constant 0 : index
    %c0_21 = arith.constant 0 : index
    %23 = vector.load %arg10[%c0_20, %c0_21] : memref<24x8xf32, #tpu.memory_space<vmem>>, vector<24x8xf32>
    tpu.vector_store %arg10[%c0_20, %c0_21], %22 {strides = array<i32>} : memref<24x8xf32, #tpu.memory_space<vmem>>, vector<24x8xf32>,
    %24 = vector.extract_strided_slice %21 {offsets = [0, 8], sizes = [24, 8], strides = [1, 1]} : vector<24x16xf32> to vector<24x8xf32>
    %cst_22 = arith.constant 0.000000e+00 : f32
    %25 = vector.broadcast %cst_22 : f32 to vector<24x8xf32>
    %26 = arith.cmpf olt, %24, %25 : vector<24x8xf32>
    %cst_23 = arith.constant 0.000000e+00 : f32
    %27 = vector.broadcast %cst_23 : f32 to vector<24x8xf32>
    %28 = arith.minimumf %24, %27 : vector<24x8xf32>
    %29 = math.exp %28 : vector<24x8xf32>
    %cst_24 = arith.constant 1.000000e+00 : f32
    %30 = vector.broadcast %cst_24 : f32 to vector<24x8xf32>
    %31 = arith.addf %24, %30 : vector<24x8xf32>
    %32 = arith.select %26, %29, %31 : vector<24x8xi1>, vector<24x8xf32>
    %c0_25 = arith.constant 0 : index
    %c0_26 = arith.constant 0 : index
    %33 = vector.load %arg11[%c0_25, %c0_26] : memref<24x8xf32, #tpu.memory_space<vmem>>, vector<24x8xf32>
    tpu.vector_store %arg11[%c0_25, %c0_26], %32 {strides = array<i32>} : memref<24x8xf32, #tpu.memory_space<vmem>>, vector<24x8xf32>,
    return
  }
  func.func @transform_0(%arg0: i32) -> (i32, i32) {
    %c0_i32 = arith.constant 0 : i32
    %c0_i32_0 = arith.constant 0 : i32
    return %arg0, %c0_i32 : i32, i32
  }
  func.func @transform_1(%arg0: i32) -> (i32, i32) {
    %c0_i32 = arith.constant 0 : i32
    %c0_i32_0 = arith.constant 0 : i32
    return %arg0, %c0_i32 : i32, i32
  }
  func.func @transform_2(%arg0: i32) -> (i32, i32) {
    %c0_i32 = arith.constant 0 : i32
    %c0_i32_0 = arith.constant 0 : i32
    %c0_i32_1 = arith.constant 0 : i32
    return %c0_i32, %c0_i32_0 : i32, i32
  }
  func.func @transform_3(%arg0: i32) -> (i32, i32) {
    %c0_i32 = arith.constant 0 : i32
    %c0_i32_0 = arith.constant 0 : i32
    %c0_i32_1 = arith.constant 0 : i32
    return %c0_i32, %c0_i32_0 : i32, i32
  }
  func.func @transform_4(%arg0: i32) -> (i32, i32) {
    %c0_i32 = arith.constant 0 : i32
    %c0_i32_0 = arith.constant 0 : i32
    %c0_i32_1 = arith.constant 0 : i32
    return %c0_i32, %c0_i32_0 : i32, i32
  }
  func.func @transform_5(%arg0: i32) -> (i32, i32) {
    %c0_i32 = arith.constant 0 : i32
    %c0_i32_0 = arith.constant 0 : i32
    %c0_i32_1 = arith.constant 0 : i32
    return %c0_i32, %c0_i32_0 : i32, i32
  }
  func.func @transform_6(%arg0: i32) -> (i32, i32) {
    %c0_i32 = arith.constant 0 : i32
    %c0_i32_0 = arith.constant 0 : i32
    %c0_i32_1 = arith.constant 0 : i32
    return %c0_i32, %c0_i32_0 : i32, i32
  }
  func.func @transform_7(%arg0: i32) -> (i32, i32) {
    %c0_i32 = arith.constant 0 : i32
    %c0_i32_0 = arith.constant 0 : i32
    %c0_i32_1 = arith.constant 0 : i32
    return %c0_i32, %c0_i32_0 : i32, i32
  }
  func.func @transform_8(%arg0: i32) -> (i32, i32) {
    %c0_i32 = arith.constant 0 : i32
    %c0_i32_0 = arith.constant 0 : i32
    %c0_i32_1 = arith.constant 0 : i32
    return %c0_i32, %c0_i32_0 : i32, i32
  }
  func.func @transform_9(%arg0: i32) -> (i32, i32) {
    %c0_i32 = arith.constant 0 : i32
    %c0_i32_0 = arith.constant 0 : i32
    return %arg0, %c0_i32 : i32, i32
  }
  func.func @transform_10(%arg0: i32) -> (i32, i32) {
    %c0_i32 = arith.constant 0 : i32
    %c0_i32_0 = arith.constant 0 : i32
    return %arg0, %c0_i32 : i32, i32
  }
}

</mosaic_0001>

<llo_original>
// kernel: split_diag_gaussian_decoder.1
$region0: #{split_diag_gaussian_decoder.1}
  #allocation0 [shape = 'u32[]', space=smem, size = 0x4, offset = 0x4, fixed_abs, tag = 'smem constant byte address 0x4 - core index']
  #allocation1 [shape = 'u32[144,128]{1,0:T(1,128)}', space=vmem, size = 0x12000, scoped, tag = 'internal scratch']
  %s0 = inlined_call_operand.vmem [shape: f32[20,200], index: 0, kind: input, shape index: {}]
  %s1 = inlined_call_operand.vmem [shape: f32[20,300], index: 1, kind: input, shape index: {}]
  %s2 = inlined_call_operand.vmem [shape: f32[200,128], index: 2, kind: input, shape index: {}]
  %s3 = inlined_call_operand.vmem [shape: f32[300,128], index: 3, kind: input, shape index: {}]
  %s4 = inlined_call_operand.vmem [shape: f32[1,128], index: 4, kind: input, shape index: {}]
  %s5 = inlined_call_operand.vmem [shape: f32[128,128], index: 5, kind: input, shape index: {}]
  %s6 = inlined_call_operand.vmem [shape: f32[1,128], index: 6, kind: input, shape index: {}]
  %s7 = inlined_call_operand.vmem [shape: f32[128,16], index: 7, kind: input, shape index: {}]
  %s8 = inlined_call_operand.vmem [shape: f32[1,16], index: 8, kind: input, shape index: {}]
  %s9 = inlined_call_operand.vmem [shape: f32[20,8], index: 9, kind: output, shape index: {0}]
  %s10 = inlined_call_operand.vmem [shape: f32[20,8], index: 10, kind: output, shape index: {1}]
  %11 = xla_tuple %s9, %s10
  %s12 = sld [smem:[#allocation0]]
  $region54: #{split_diag_gaussian_decoder.1} parent=0
    _
  %s14 = ssub.s32 1, %s12
  %s15 = scalar_select 0, %s14, %s12
  // Predicated region
  $region2: #{split_diag_gaussian_decoder.1} parent=0 // pred_check
    _
  $region3: #{split_diag_gaussian_decoder.1} parent=0 // pred_check_branch
    %17 = sbr.rel (0) target = $region5
  $region4: #{split_diag_gaussian_decoder.1} parent=0 // pred_region
    _
  $region5: #{split_diag_gaussian_decoder.1} parent=0 // pred_fallthru
    _
  // Predicated region
  $region6: #{split_diag_gaussian_decoder.1} parent=0 // pred_check
    _
  $region7: #{split_diag_gaussian_decoder.1} parent=0 // pred_check_branch
    %19 = sbr.rel (0) target = $region9
  $region8: #{split_diag_gaussian_decoder.1} parent=0 // pred_region
    _
  $region9: #{split_diag_gaussian_decoder.1} parent=0 // pred_fallthru
    _
  // Predicated region
  $region10: #{split_diag_gaussian_decoder.1} parent=0 // pred_check
    _
  $region11: #{split_diag_gaussian_decoder.1} parent=0 // pred_check_branch
    %21 = sbr.rel (0) target = $region13
  $region12: #{split_diag_gaussian_decoder.1} parent=0 // pred_region
    _
  $region13: #{split_diag_gaussian_decoder.1} parent=0 // pred_fallthru
    _
  // Predicated region
  $region14: #{split_diag_gaussian_decoder.1} parent=0 // pred_check
    _
  $region15: #{split_diag_gaussian_decoder.1} parent=0 // pred_check_branch
    %23 = sbr.rel (0) target = $region17
  $region16: #{split_diag_gaussian_decoder.1} parent=0 // pred_region
    _
  $region17: #{split_diag_gaussian_decoder.1} parent=0 // pred_fallthru
    _
  // Predicated region
  $region18: #{split_diag_gaussian_decoder.1} parent=0 // pred_check
    _
  $region19: #{split_diag_gaussian_decoder.1} parent=0 // pred_check_branch
    %25 = sbr.rel (0) target = $region21
  $region20: #{split_diag_gaussian_decoder.1} parent=0 // pred_region
    _
  $region21: #{split_diag_gaussian_decoder.1} parent=0 // pred_fallthru
    _
  // Predicated region
  $region22: #{split_diag_gaussian_decoder.1} parent=0 // pred_check
    _
  $region23: #{split_diag_gaussian_decoder.1} parent=0 // pred_check_branch
    %27 = sbr.rel (0) target = $region25
  $region24: #{split_diag_gaussian_decoder.1} parent=0 // pred_region
    _
  $region25: #{split_diag_gaussian_decoder.1} parent=0 // pred_fallthru
    _
  // Predicated region
  $region26: #{split_diag_gaussian_decoder.1} parent=0 // pred_check
    _
  $region27: #{split_diag_gaussian_decoder.1} parent=0 // pred_check_branch
    %29 = sbr.rel (0) target = $region29
  $region28: #{split_diag_gaussian_decoder.1} parent=0 // pred_region
    _
  $region29: #{split_diag_gaussian_decoder.1} parent=0 // pred_fallthru
    _
  // Predicated region
  $region30: #{split_diag_gaussian_decoder.1} parent=0 // pred_check
    _
  $region31: #{split_diag_gaussian_decoder.1} parent=0 // pred_check_branch
    %31 = sbr.rel (0) target = $region33
  $region32: #{split_diag_gaussian_decoder.1} parent=0 // pred_region
    _
  $region33: #{split_diag_gaussian_decoder.1} parent=0 // pred_fallthru
    _
  // Predicated region
  $region34: #{split_diag_gaussian_decoder.1} parent=0 // pred_check
    _
  $region35: #{split_diag_gaussian_decoder.1} parent=0 // pred_check_branch
    %33 = sbr.rel (0) target = $region37
  $region36: #{split_diag_gaussian_decoder.1} parent=0 // pred_region
    _
  $region37: #{split_diag_gaussian_decoder.1} parent=0 // pred_fallthru
    _
  %v34 = vld [vmem:[%s0] sm:$0xff]
  %v35 = vld [vmem:[%s0 + $0x8] sm:$0xff]
  %v36 = vld [vmem:[%s0 + $0x10] sm:$0xff]
  %v37 = vld [vmem:[%s0 + $0x18] sm:$0xff]
  %v38 = vld [vmem:[%s0 + $0x20] sm:$0xff]
  %v39 = vld [vmem:[%s0 + $0x28] sm:$0xff]
  %v40 = vld [vmem:[%s1] sm:$0xff]
  %v41 = vld [vmem:[%s1 + $0x8] sm:$0xff]
  %v42 = vld [vmem:[%s1 + $0x10] sm:$0xff]
  %v43 = vld [vmem:[%s1 + $0x18] sm:$0xff]
  %v44 = vld [vmem:[%s1 + $0x20] sm:$0xff]
  %v45 = vld [vmem:[%s1 + $0x28] sm:$0xff]
  %v46 = vld [vmem:[%s1 + $0x30] sm:$0xff]
  %v47 = vld [vmem:[%s1 + $0x38] sm:$0xff]
  %v48 = vld [vmem:[%s1 + $0x40] sm:$0xff]
  %v49 = vld [vmem:[%s2] sm:$0xff]
  %v50 = vld [vmem:[%s2 + $0x8] sm:$0xff]
  %v51 = vld [vmem:[%s2 + $0x10] sm:$0xff]
  %v52 = vld [vmem:[%s2 + $0x18] sm:$0xff]
  %v53 = vld [vmem:[%s2 + $0x20] sm:$0xff]
  %v54 = vld [vmem:[%s2 + $0x28] sm:$0xff]
  %v55 = vld [vmem:[%s2 + $0x30] sm:$0xff]
  %v56 = vld [vmem:[%s2 + $0x38] sm:$0xff]
  %v57 = vld [vmem:[%s2 + $0x40] sm:$0xff]
  %v58 = vld [vmem:[%s2 + $0x48] sm:$0xff]
  %v59 = vld [vmem:[%s2 + $0x50] sm:$0xff]
  %v60 = vld [vmem:[%s2 + $0x58] sm:$0xff]
  %v61 = vld [vmem:[%s2 + $0x60] sm:$0xff]
  %v62 = vld [vmem:[%s2 + $0x68] sm:$0xff]
  %v63 = vld [vmem:[%s2 + $0x70] sm:$0xff]
  %v64 = vld [vmem:[%s2 + $0x78] sm:$0xff]
  %v65 = vld [vmem:[%s2 + $0x80] sm:$0xff]
  %v66 = vld [vmem:[%s2 + $0x88] sm:$0xff]
  %v67 = vld [vmem:[%s2 + $0x90] sm:$0xff]
  %v68 = vld [vmem:[%s2 + $0x98] sm:$0xff]
  %v69 = vld [vmem:[%s2 + $0xa0] sm:$0xff]
  %v70 = vld [vmem:[%s2 + $0xa8] sm:$0xff]
  %v71 = vld [vmem:[%s2 + $0xb0] sm:$0xff]
  %v72 = vld [vmem:[%s2 + $0xb8] sm:$0xff]
  %v73 = vld [vmem:[%s2 + $0xc0] sm:$0xff]
  %v74 = vld [vmem:[%s3] sm:$0xff]
  %v75 = vld [vmem:[%s3 + $0x8] sm:$0xff]
  %v76 = vld [vmem:[%s3 + $0x10] sm:$0xff]
  %v77 = vld [vmem:[%s3 + $0x18] sm:$0xff]
  %v78 = vld [vmem:[%s3 + $0x20] sm:$0xff]
  %v79 = vld [vmem:[%s3 + $0x28] sm:$0xff]
  %v80 = vld [vmem:[%s3 + $0x30] sm:$0xff]
  %v81 = vld [vmem:[%s3 + $0x38] sm:$0xff]
  %v82 = vld [vmem:[%s3 + $0x40] sm:$0xff]
  %v83 = vld [vmem:[%s3 + $0x48] sm:$0xff]
  %v84 = vld [vmem:[%s3 + $0x50] sm:$0xff]
  %v85 = vld [vmem:[%s3 + $0x58] sm:$0xff]
  %v86 = vld [vmem:[%s3 + $0x60] sm:$0xff]
  %v87 = vld [vmem:[%s3 + $0x68] sm:$0xff]
  %v88 = vld [vmem:[%s3 + $0x70] sm:$0xff]
  %v89 = vld [vmem:[%s3 + $0x78] sm:$0xff]
  %v90 = vld [vmem:[%s3 + $0x80] sm:$0xff]
  %v91 = vld [vmem:[%s3 + $0x88] sm:$0xff]
  %v92 = vld [vmem:[%s3 + $0x90] sm:$0xff]
  %v93 = vld [vmem:[%s3 + $0x98] sm:$0xff]
  %v94 = vld [vmem:[%s3 + $0xa0] sm:$0xff]
  %v95 = vld [vmem:[%s3 + $0xa8] sm:$0xff]
  %v96 = vld [vmem:[%s3 + $0xb0] sm:$0xff]
  %v97 = vld [vmem:[%s3 + $0xb8] sm:$0xff]
  %v98 = vld [vmem:[%s3 + $0xc0] sm:$0xff]
  %v99 = vld [vmem:[%s3 + $0xc8] sm:$0xff]
  %v100 = vld [vmem:[%s3 + $0xd0] sm:$0xff]
  %v101 = vld [vmem:[%s3 + $0xd8] sm:$0xff]
  %v102 = vld [vmem:[%s3 + $0xe0] sm:$0xff]
  %v103 = vld [vmem:[%s3 + $0xe8] sm:$0xff]
  %v104 = vld [vmem:[%s3 + $0xf0] sm:$0xff]
  %v105 = vld [vmem:[%s3 + $0xf8] sm:$0xff]
  %v106 = vld [vmem:[%s3 + $0x100] sm:$0xff]
  %v107 = vld [vmem:[%s3 + $0x108] sm:$0xff]
  %v108 = vld [vmem:[%s3 + $0x110] sm:$0xff]
  %v109 = vld [vmem:[%s3 + $0x118] sm:$0xff]
  %v110 = vld [vmem:[%s3 + $0x120] sm:$0xff]
  %v111 = vld [vmem:[%s3 + $0x128] sm:$0xf]
  %vm112 = vcmask 359424
  %v114 = vsel %vm112, %v42, 0
  %v117 = vsel %vm112, %v45, 0
  %v120 = vsel %vm112, %v48, 0
  %vm122 = vcmask 1043456
  %v124 = vsel %vm122, %v111, 0
  %126 = vmatprep.subr.mxu0 0.0
  %127 = vmatpush1.msra.mxu0 %v74
  %128 = vmatprep.subr.mxu0 0.0
  %129 = vmatpush1.msra.mxu0 %v75
  %130 = vmatprep.subr.mxu0 0.0
  %131 = vmatpush1.msra.mxu0 %v76
  %132 = vmatprep.subr.mxu0 0.0
  %133 = vmatpush1.msra.mxu0 %v77
  %134 = vmatprep.subr.mxu0 0.0
  %135 = vmatpush1.msra.mxu0 %v78
  %136 = vmatprep.subr.mxu0 0.0
  %137 = vmatpush1.msra.mxu0 %v79
  %138 = vmatprep.subr.mxu0 0.0
  %139 = vmatpush1.msra.mxu0 %v80
  %140 = vmatprep.subr.mxu0 0.0
  %141 = vmatpush1.msra.mxu0 %v81
  %142 = vmatprep.subr.mxu0 0.0
  %143 = vmatpush1.msra.mxu0 %v82
  %144 = vmatprep.subr.mxu0 0.0
  %145 = vmatpush1.msra.mxu0 %v83
  %146 = vmatprep.subr.mxu0 0.0
  %147 = vmatpush1.msra.mxu0 %v84
  %148 = vmatprep.subr.mxu0 0.0
  %149 = vmatpush1.msra.mxu0 %v85
  %150 = vmatprep.subr.mxu0 0.0
  %151 = vmatpush1.msra.mxu0 %v86
  %152 = vmatprep.subr.mxu0 0.0
  %153 = vmatpush1.msra.mxu0 %v87
  %154 = vmatprep.subr.mxu0 0.0
  %155 = vmatpush1.msra.mxu0 %v88
  %156 = vmatprep.subr.mxu0 0.0
  %157 = vmatpush1.msra.mxu0 %v89
  %158 = vmatprep.subr.mxu0 0.0
  %159 = vmatpush1.msra.mxu0 %v90
  %160 = vmatprep.subr.mxu0 0.0
  %161 = vmatpush1.msra.mxu0 %v91
  %162 = vmatprep.subr.mxu0 0.0
  %163 = vmatpush1.msra.mxu0 %v92
  %164 = vmatprep.subr.mxu0 0.0
  %165 = vmatpush1.msra.mxu0 %v93
  %166 = vmatprep.subr.mxu0 0.0
  %167 = vmatpush1.msra.mxu0 %v94
  %168 = vmatprep.subr.mxu0 0.0
  %169 = vmatpush1.msra.mxu0 %v95
  %170 = vmatprep.subr.mxu0 0.0
  %171 = vmatpush1.msra.mxu0 %v96
  %172 = vmatprep.subr.mxu0 0.0
  %173 = vmatpush1.msra.mxu0 %v97
  %174 = vmatprep.subr.mxu0 0.0
  %175 = vmatpush1.msra.mxu0 %v98
  %176 = vmatprep.subr.mxu0 0.0
  %177 = vmatpush1.msra.mxu0 %v99
  %178 = vmatprep.subr.mxu0 0.0
  %179 = vmatpush1.msra.mxu0 %v100
  %180 = vmatprep.subr.mxu0 0.0
  %181 = vmatpush1.msra.mxu0 %v101
  %182 = vmatprep.subr.mxu0 0.0
  %183 = vmatpush1.msra.mxu0 %v102
  %184 = vmatprep.subr.mxu0 0.0
  %185 = vmatpush1.msra.mxu0 %v103
  %186 = vmatprep.subr.mxu0 0.0
  %187 = vmatpush1.msra.mxu0 %v104
  %188 = vmatprep.subr.mxu0 0.0
  %189 = vmatpush1.msra.mxu0 %v105
  %190 = vmatprep.mubr.f32.mxu0 %v41
  %191 = vmatmul.mubr.f32.gmra.mrb[0].mxu0 %v40
  %v192 = vpop.f32.mrb[0].mxu0
  %v193 = vadd.f32 0.0, %v192
  %v194 = vpop.f32.mrb[0].mxu0
  %195 = vmatprep.mubr.f32.mxu0 %v44
  %196 = vmatmul.mubr.f32.gmra.mrb[0].mxu0 %v43
  %v197 = vpop.f32.mrb[0].mxu0
  %v198 = vadd.f32 0.0, %v197
  %v199 = vpop.f32.mrb[0].mxu0
  %200 = vmatprep.mubr.f32.mxu0 %v47
  %201 = vmatmul.mubr.f32.gmra.mrb[0].mxu0 %v46
  %v202 = vpop.f32.mrb[0].mxu0
  %v203 = vadd.f32 0.0, %v202
  %v204 = vpop.f32.mrb[0].mxu0
  %205 = vdwg.mxu0
  %206 = vmatprep.subr.mxu0 0.0
  %207 = vmatpush1.msra.mxu0 %v106
  %208 = vmatprep.subr.mxu0 0.0
  %209 = vmatpush1.msra.mxu0 %v107
  %210 = vmatprep.subr.mxu0 0.0
  %211 = vmatpush1.msra.mxu0 %v108
  %212 = vmatprep.subr.mxu0 0.0
  %213 = vmatpush1.msra.mxu0 %v109
  %214 = vmatprep.subr.mxu0 0.0
  %215 = vmatpush1.msra.mxu0 %v110
  %216 = vmatprep.subr.mxu0 0.0
  %217 = vmatpush1.msra.mxu0 %v124
  %218 = vmatprep.subr.mxu0 0.0
  %219 = vmatpush1.msra.mxu0 0.0
  %220 = vmatprep.subr.mxu0 0.0
  %221 = vmatpush1.msra.mxu0 0.0
  %222 = vmatprep.subr.mxu0 0.0
  %223 = vmatpush1.msra.mxu0 0.0
  %224 = vmatprep.subr.mxu0 0.0
  %225 = vmatpush1.msra.mxu0 0.0
  %226 = vmatprep.subr.mxu0 0.0
  %227 = vmatpush1.msra.mxu0 0.0
  %228 = vmatprep.subr.mxu0 0.0
  %229 = vmatpush1.msra.mxu0 0.0
  %230 = vmatprep.subr.mxu0 0.0
  %231 = vmatpush1.msra.mxu0 0.0
  %232 = vmatprep.subr.mxu0 0.0
  %233 = vmatpush1.msra.mxu0 0.0
  %234 = vmatprep.subr.mxu0 0.0
  %235 = vmatpush1.msra.mxu0 0.0
  %236 = vmatprep.subr.mxu0 0.0
  %237 = vmatpush1.msra.mxu0 0.0
  %238 = vmatprep.subr.mxu0 0.0
  %239 = vmatpush1.msra.mxu0 0.0
  %240 = vmatprep.subr.mxu0 0.0
  %241 = vmatpush1.msra.mxu0 0.0
  %242 = vmatprep.subr.mxu0 0.0
  %243 = vmatpush1.msra.mxu0 0.0
  %244 = vmatprep.subr.mxu0 0.0
  %245 = vmatpush1.msra.mxu0 0.0
  %246 = vmatprep.subr.mxu0 0.0
  %247 = vmatpush1.msra.mxu0 0.0
  %248 = vmatprep.subr.mxu0 0.0
  %249 = vmatpush1.msra.mxu0 0.0
  %250 = vmatprep.subr.mxu0 0.0
  %251 = vmatpush1.msra.mxu0 0.0
  %252 = vmatprep.subr.mxu0 0.0
  %253 = vmatpush1.msra.mxu0 0.0
  %254 = vmatprep.subr.mxu0 0.0
  %255 = vmatpush1.msra.mxu0 0.0
  %256 = vmatprep.subr.mxu0 0.0
  %257 = vmatpush1.msra.mxu0 0.0
  %258 = vmatprep.subr.mxu0 0.0
  %259 = vmatpush1.msra.mxu0 0.0
  %260 = vmatprep.subr.mxu0 0.0
  %261 = vmatpush1.msra.mxu0 0.0
  %262 = vmatprep.subr.mxu0 0.0
  %263 = vmatpush1.msra.mxu0 0.0
  %264 = vmatprep.subr.mxu0 0.0
  %265 = vmatpush1.msra.mxu0 0.0
  %266 = vmatprep.subr.mxu0 0.0
  %267 = vmatpush1.msra.mxu0 0.0
  %268 = vmatprep.subr.mxu0 0.0
  %269 = vmatpush1.msra.mxu0 0.0
  %270 = vmatprep.mubr.f32.mxu0 0.0
  %271 = vmatmul.mubr.f32.gmra.mrb[0].mxu0 %v114
  %v272 = vpop.f32.mrb[0].mxu0
  %v273 = vadd.f32 %v193, %v272
  %v274 = vpop.f32.mrb[0].mxu0
  %275 = vmatprep.mubr.f32.mxu0 0.0
  %276 = vmatmul.mubr.f32.gmra.mrb[0].mxu0 %v117
  %v277 = vpop.f32.mrb[0].mxu0
  %v278 = vadd.f32 %v198, %v277
  %v279 = vpop.f32.mrb[0].mxu0
  %280 = vmatprep.mubr.f32.mxu0 0.0
  %281 = vmatmul.mubr.f32.gmra.mrb[0].mxu0 %v120
  %v282 = vpop.f32.mrb[0].mxu0
  %v283 = vadd.f32 %v203, %v282
  %v284 = vpop.f32.mrb[0].mxu0
  %285 = vdwg.mxu0
  %vm286 = vcmask 588800
  %v288 = vsel %vm286, %v35, 0
  %v291 = vsel %vm286, %v37, 0
  %v294 = vsel %vm286, %v39, 0
  %296 = vmatprep.subr.mxu0 0.0
  %297 = vmatpush1.msra.mxu0 %v49
  %298 = vmatprep.subr.mxu0 0.0
  %299 = vmatpush1.msra.mxu0 %v50
  %300 = vmatprep.subr.mxu0 0.0
  %301 = vmatpush1.msra.mxu0 %v51
  %302 = vmatprep.subr.mxu0 0.0
  %303 = vmatpush1.msra.mxu0 %v52
  %304 = vmatprep.subr.mxu0 0.0
  %305 = vmatpush1.msra.mxu0 %v53
  %306 = vmatprep.subr.mxu0 0.0
  %307 = vmatpush1.msra.mxu0 %v54
  %308 = vmatprep.subr.mxu0 0.0
  %309 = vmatpush1.msra.mxu0 %v55
  %310 = vmatprep.subr.mxu0 0.0
  %311 = vmatpush1.msra.mxu0 %v56
  %312 = vmatprep.subr.mxu0 0.0
  %313 = vmatpush1.msra.mxu0 %v57
  %314 = vmatprep.subr.mxu0 0.0
  %315 = vmatpush1.msra.mxu0 %v58
  %316 = vmatprep.subr.mxu0 0.0
  %317 = vmatpush1.msra.mxu0 %v59
  %318 = vmatprep.subr.mxu0 0.0
  %319 = vmatpush1.msra.mxu0 %v60
  %320 = vmatprep.subr.mxu0 0.0
  %321 = vmatpush1.msra.mxu0 %v61
  %322 = vmatprep.subr.mxu0 0.0
  %323 = vmatpush1.msra.mxu0 %v62
  %324 = vmatprep.subr.mxu0 0.0
  %325 = vmatpush1.msra.mxu0 %v63
  %326 = vmatprep.subr.mxu0 0.0
  %327 = vmatpush1.msra.mxu0 %v64
  %328 = vmatprep.subr.mxu0 0.0
  %329 = vmatpush1.msra.mxu0 %v65
  %330 = vmatprep.subr.mxu0 0.0
  %331 = vmatpush1.msra.mxu0 %v66
  %332 = vmatprep.subr.mxu0 0.0
  %333 = vmatpush1.msra.mxu0 %v67
  %334 = vmatprep.subr.mxu0 0.0
  %335 = vmatpush1.msra.mxu0 %v68
  %336 = vmatprep.subr.mxu0 0.0
  %337 = vmatpush1.msra.mxu0 %v69
  %338 = vmatprep.subr.mxu0 0.0
  %339 = vmatpush1.msra.mxu0 %v70
  %340 = vmatprep.subr.mxu0 0.0
  %341 = vmatpush1.msra.mxu0 %v71
  %342 = vmatprep.subr.mxu0 0.0
  %343 = vmatpush1.msra.mxu0 %v72
  %344 = vmatprep.subr.mxu0 0.0
  %345 = vmatpush1.msra.mxu0 %v73
  %346 = vmatprep.subr.mxu0 0.0
  %347 = vmatpush1.msra.mxu0 0.0
  %348 = vmatprep.subr.mxu0 0.0
  %349 = vmatpush1.msra.mxu0 0.0
  %350 = vmatprep.subr.mxu0 0.0
  %351 = vmatpush1.msra.mxu0 0.0
  %352 = vmatprep.subr.mxu0 0.0
  %353 = vmatpush1.msra.mxu0 0.0
  %354 = vmatprep.subr.mxu0 0.0
  %355 = vmatpush1.msra.mxu0 0.0
  %356 = vmatprep.subr.mxu0 0.0
  %357 = vmatpush1.msra.mxu0 0.0
  %358 = vmatprep.subr.mxu0 0.0
  %359 = vmatpush1.msra.mxu0 0.0
  %360 = vmatprep.mubr.f32.mxu0 %v288
  %361 = vmatmul.mubr.f32.gmra.mrb[0].mxu0 %v34
  %v362 = vpop.f32.mrb[0].mxu0
  %v363 = vadd.f32 %v273, %v362
  %v364 = vpop.f32.mrb[0].mxu0
  %365 = vmatprep.mubr.f32.mxu0 %v291
  %366 = vmatmul.mubr.f32.gmra.mrb[0].mxu0 %v36
  %v367 = vpop.f32.mrb[0].mxu0
  %v368 = vadd.f32 %v278, %v367
  %v369 = vpop.f32.mrb[0].mxu0
  %370 = vmatprep.mubr.f32.mxu0 %v294
  %371 = vmatmul.mubr.f32.gmra.mrb[0].mxu0 %v38
  %v372 = vpop.f32.mrb[0].mxu0
  %v373 = vadd.f32 %v283, %v372
  %v374 = vpop.f32.mrb[0].mxu0
  %375 = vdwg.mxu0
  %v376 = vld [vmem:[%s4] sm:$0x1]
  %v378 = vlaneseq
  %v379 = vshrl.u32 %v378, 7
  %v380 = vsub.s32 0, %v379
  %v381 = vrot.slane %v376, %v380
  %v383 = vadd.f32 %v363, %v381
  %v384 = vadd.f32 %v368, %v381
  %v385 = vadd.f32 %v373, %v381
  %v386 = vtanh.pop %v383
  %v387 = vtanh.pop %v384
  %v388 = vtanh.pop %v385
  %v389 = vld [vmem:[%s5] sm:$0xff]
  %v390 = vld [vmem:[%s5 + $0x8] sm:$0xff]
  %v391 = vld [vmem:[%s5 + $0x10] sm:$0xff]
  %v392 = vld [vmem:[%s5 + $0x18] sm:$0xff]
  %v393 = vld [vmem:[%s5 + $0x20] sm:$0xff]
  %v394 = vld [vmem:[%s5 + $0x28] sm:$0xff]
  %v395 = vld [vmem:[%s5 + $0x30] sm:$0xff]
  %v396 = vld [vmem:[%s5 + $0x38] sm:$0xff]
  %v397 = vld [vmem:[%s5 + $0x40] sm:$0xff]
  %v398 = vld [vmem:[%s5 + $0x48] sm:$0xff]
  %v399 = vld [vmem:[%s5 + $0x50] sm:$0xff]
  %v400 = vld [vmem:[%s5 + $0x58] sm:$0xff]
  %v401 = vld [vmem:[%s5 + $0x60] sm:$0xff]
  %v402 = vld [vmem:[%s5 + $0x68] sm:$0xff]
  %v403 = vld [vmem:[%s5 + $0x70] sm:$0xff]
  %v404 = vld [vmem:[%s5 + $0x78] sm:$0xff]
  %v405 = vld [vmem:[%s6] sm:$0x1]
  %v407 = vlaneseq
  %v408 = vshrl.u32 %v407, 7
  %v409 = vsub.s32 0, %v408
  %v410 = vrot.slane %v405, %v409
  %412 = vmatprep.subr.mxu0 0.0
  %413 = vmatpush1.msra.mxu0 %v389
  %414 = vmatprep.subr.mxu0 0.0
  %415 = vmatpush1.msra.mxu0 %v390
  %416 = vmatprep.subr.mxu0 0.0
  %417 = vmatpush1.msra.mxu0 %v391
  %418 = vmatprep.subr.mxu0 0.0
  %419 = vmatpush1.msra.mxu0 %v392
  %420 = vmatprep.subr.mxu0 0.0
  %421 = vmatpush1.msra.mxu0 %v393
  %422 = vmatprep.subr.mxu0 0.0
  %423 = vmatpush1.msra.mxu0 %v394
  %424 = vmatprep.subr.mxu0 0.0
  %425 = vmatpush1.msra.mxu0 %v395
  %426 = vmatprep.subr.mxu0 0.0
  %427 = vmatpush1.msra.mxu0 %v396
  %428 = vmatprep.subr.mxu0 0.0
  %429 = vmatpush1.msra.mxu0 %v397
  %430 = vmatprep.subr.mxu0 0.0
  %431 = vmatpush1.msra.mxu0 %v398
  %432 = vmatprep.subr.mxu0 0.0
  %433 = vmatpush1.msra.mxu0 %v399
  %434 = vmatprep.subr.mxu0 0.0
  %435 = vmatpush1.msra.mxu0 %v400
  %436 = vmatprep.subr.mxu0 0.0
  %437 = vmatpush1.msra.mxu0 %v401
  %438 = vmatprep.subr.mxu0 0.0
  %439 = vmatpush1.msra.mxu0 %v402
  %440 = vmatprep.subr.mxu0 0.0
  %441 = vmatpush1.msra.mxu0 %v403
  %442 = vmatprep.subr.mxu0 0.0
  %443 = vmatpush1.msra.mxu0 %v404
  %444 = vmatprep.subr.mxu0 0.0
  %445 = vmatpush1.msra.mxu0 0.0
  %446 = vmatprep.subr.mxu0 0.0
  %447 = vmatpush1.msra.mxu0 0.0
  %448 = vmatprep.subr.mxu0 0.0
  %449 = vmatpush1.msra.mxu0 0.0
  %450 = vmatprep.subr.mxu0 0.0
  %451 = vmatpush1.msra.mxu0 0.0
  %452 = vmatprep.subr.mxu0 0.0
  %453 = vmatpush1.msra.mxu0 0.0
  %454 = vmatprep.subr.mxu0 0.0
  %455 = vmatpush1.msra.mxu0 0.0
  %456 = vmatprep.subr.mxu0 0.0
  %457 = vmatpush1.msra.mxu0 0.0
  %458 = vmatprep.subr.mxu0 0.0
  %459 = vmatpush1.msra.mxu0 0.0
  %460 = vmatprep.subr.mxu0 0.0
  %461 = vmatpush1.msra.mxu0 0.0
  %462 = vmatprep.subr.mxu0 0.0
  %463 = vmatpush1.msra.mxu0 0.0
  %464 = vmatprep.subr.mxu0 0.0
  %465 = vmatpush1.msra.mxu0 0.0
  %466 = vmatprep.subr.mxu0 0.0
  %467 = vmatpush1.msra.mxu0 0.0
  %468 = vmatprep.subr.mxu0 0.0
  %469 = vmatpush1.msra.mxu0 0.0
  %470 = vmatprep.subr.mxu0 0.0
  %471 = vmatpush1.msra.mxu0 0.0
  %472 = vmatprep.subr.mxu0 0.0
  %473 = vmatpush1.msra.mxu0 0.0
  %474 = vmatprep.subr.mxu0 0.0
  %475 = vmatpush1.msra.mxu0 0.0
  %476 = vmatprep.mubr.f32.mxu0 0.0
  %477 = vmatmul.mubr.f32.gmra.mrb[0].mxu0 %v386
  %v478 = vpop.f32.mrb[0].mxu0
  %v479 = vadd.f32 %v410, %v478
  %v480 = vpop.f32.mrb[0].mxu0
  %481 = vmatprep.mubr.f32.mxu0 0.0
  %482 = vmatmul.mubr.f32.gmra.mrb[0].mxu0 %v387
  %v483 = vpop.f32.mrb[0].mxu0
  %v484 = vadd.f32 %v410, %v483
  %v485 = vpop.f32.mrb[0].mxu0
  %486 = vmatprep.mubr.f32.mxu0 0.0
  %487 = vmatmul.mubr.f32.gmra.mrb[0].mxu0 %v388
  %v488 = vpop.f32.mrb[0].mxu0
  %v489 = vadd.f32 %v410, %v488
  %v490 = vpop.f32.mrb[0].mxu0
  %491 = vdwg.mxu0
  %v492 = vtanh.pop %v479
  %v493 = vtanh.pop %v484
  %v494 = vtanh.pop %v489
  %v495 = vld [vmem:[%s7] sm:$0xff]
  %v496 = vld [vmem:[%s7 + $0x8] sm:$0xff]
  %v497 = vld [vmem:[%s7 + $0x10] sm:$0xff]
  %v498 = vld [vmem:[%s7 + $0x18] sm:$0xff]
  %v499 = vld [vmem:[%s7 + $0x20] sm:$0xff]
  %v500 = vld [vmem:[%s7 + $0x28] sm:$0xff]
  %v501 = vld [vmem:[%s7 + $0x30] sm:$0xff]
  %v502 = vld [vmem:[%s7 + $0x38] sm:$0xff]
  %v503 = vld [vmem:[%s7 + $0x40] sm:$0xff]
  %v504 = vld [vmem:[%s7 + $0x48] sm:$0xff]
  %v505 = vld [vmem:[%s7 + $0x50] sm:$0xff]
  %v506 = vld [vmem:[%s7 + $0x58] sm:$0xff]
  %v507 = vld [vmem:[%s7 + $0x60] sm:$0xff]
  %v508 = vld [vmem:[%s7 + $0x68] sm:$0xff]
  %v509 = vld [vmem:[%s7 + $0x70] sm:$0xff]
  %v510 = vld [vmem:[%s7 + $0x78] sm:$0xff]
  %v511 = vld [vmem:[%s8] sm:$0x1]
  %v513 = vlaneseq
  %v514 = vshrl.u32 %v513, 7
  %v515 = vsub.s32 0, %v514
  %v516 = vrot.slane %v511, %v515
  %518 = vmatprep.subr.mxu0 0.0
  %519 = vmatpush1.msra.mxu0 %v495
  %520 = vmatprep.subr.mxu0 0.0
  %521 = vmatpush1.msra.mxu0 %v496
  %522 = vmatprep.subr.mxu0 0.0
  %523 = vmatpush1.msra.mxu0 %v497
  %524 = vmatprep.subr.mxu0 0.0
  %525 = vmatpush1.msra.mxu0 %v498
  %526 = vmatprep.subr.mxu0 0.0
  %527 = vmatpush1.msra.mxu0 %v499
  %528 = vmatprep.subr.mxu0 0.0
  %529 = vmatpush1.msra.mxu0 %v500
  %530 = vmatprep.subr.mxu0 0.0
  %531 = vmatpush1.msra.mxu0 %v501
  %532 = vmatprep.subr.mxu0 0.0
  %533 = vmatpush1.msra.mxu0 %v502
  %534 = vmatprep.subr.mxu0 0.0
  %535 = vmatpush1.msra.mxu0 %v503
  %536 = vmatprep.subr.mxu0 0.0
  %537 = vmatpush1.msra.mxu0 %v504
  %538 = vmatprep.subr.mxu0 0.0
  %539 = vmatpush1.msra.mxu0 %v505
  %540 = vmatprep.subr.mxu0 0.0
  %541 = vmatpush1.msra.mxu0 %v506
  %542 = vmatprep.subr.mxu0 0.0
  %543 = vmatpush1.msra.mxu0 %v507
  %544 = vmatprep.subr.mxu0 0.0
  %545 = vmatpush1.msra.mxu0 %v508
  %546 = vmatprep.subr.mxu0 0.0
  %547 = vmatpush1.msra.mxu0 %v509
  %548 = vmatprep.subr.mxu0 0.0
  %549 = vmatpush1.msra.mxu0 %v510
  %550 = vmatprep.subr.mxu0 0.0
  %551 = vmatpush1.msra.mxu0 0.0
  %552 = vmatprep.subr.mxu0 0.0
  %553 = vmatpush1.msra.mxu0 0.0
  %554 = vmatprep.subr.mxu0 0.0
  %555 = vmatpush1.msra.mxu0 0.0
  %556 = vmatprep.subr.mxu0 0.0
  %557 = vmatpush1.msra.mxu0 0.0
  %558 = vmatprep.subr.mxu0 0.0
  %559 = vmatpush1.msra.mxu0 0.0
  %560 = vmatprep.subr.mxu0 0.0
  %561 = vmatpush1.msra.mxu0 0.0
  %562 = vmatprep.subr.mxu0 0.0
  %563 = vmatpush1.msra.mxu0 0.0
  %564 = vmatprep.subr.mxu0 0.0
  %565 = vmatpush1.msra.mxu0 0.0
  %566 = vmatprep.subr.mxu0 0.0
  %567 = vmatpush1.msra.mxu0 0.0
  %568 = vmatprep.subr.mxu0 0.0
  %569 = vmatpush1.msra.mxu0 0.0
  %570 = vmatprep.subr.mxu0 0.0
  %571 = vmatpush1.msra.mxu0 0.0
  %572 = vmatprep.subr.mxu0 0.0
  %573 = vmatpush1.msra.mxu0 0.0
  %574 = vmatprep.subr.mxu0 0.0
  %575 = vmatpush1.msra.mxu0 0.0
  %576 = vmatprep.subr.mxu0 0.0
  %577 = vmatpush1.msra.mxu0 0.0
  %578 = vmatprep.subr.mxu0 0.0
  %579 = vmatpush1.msra.mxu0 0.0
  %580 = vmatprep.subr.mxu0 0.0
  %581 = vmatpush1.msra.mxu0 0.0
  %582 = vmatprep.mubr.f32.mxu0 0.0
  %583 = vmatmul.mubr.f32.gmra.mrb[0].mxu0 %v492
  %v584 = vpop.f32.mrb[0].mxu0
  %v585 = vadd.f32 %v516, %v584
  %v586 = vpop.f32.mrb[0].mxu0
  %587 = vmatprep.mubr.f32.mxu0 0.0
  %588 = vmatmul.mubr.f32.gmra.mrb[0].mxu0 %v493
  %v589 = vpop.f32.mrb[0].mxu0
  %v590 = vadd.f32 %v516, %v589
  %v591 = vpop.f32.mrb[0].mxu0
  %592 = vmatprep.mubr.f32.mxu0 0.0
  %593 = vmatmul.mubr.f32.gmra.mrb[0].mxu0 %v494
  %v594 = vpop.f32.mrb[0].mxu0
  %v595 = vadd.f32 %v516, %v594
  %v596 = vpop.f32.mrb[0].mxu0
  %597 = vdwg.mxu0
  %vm598 = vcmask 64512
  %599 = vst.msk [vmem:[%s9] sm:$0xff] %vm598, %v585
  %600 = vst.msk [vmem:[%s9 + $0x8] sm:$0xff] %vm598, %v590
  %601 = vst.msk [vmem:[%s9 + $0x10] sm:$0xff] %vm598, %v595
  %vm602 = vcmp.lt.f32.partialorder %v585, 0.0
  %vm603 = vcmp.lt.f32.partialorder %v590, 0.0
  %vm604 = vcmp.lt.f32.partialorder %v595, 0.0
  %v605 = vmin.f32 %v585, 0.0
  %v606 = vmin.f32 %v590, 0.0
  %v607 = vmin.f32 %v595, 0.0
  %v608 = vmul.f32 %v605, 1.442695
  %v609 = vpow.pop %v608
  %v610 = vmul.f32 %v606, 1.442695
  %v611 = vpow.pop %v610
  %v612 = vmul.f32 %v607, 1.442695
  %v613 = vpow.pop %v612
  %v614 = vadd.f32 %v585, 1.0
  %v615 = vadd.f32 %v590, 1.0
  %v616 = vadd.f32 %v595, 1.0
  %v617 = vsel %vm602, %v609, %v614
  %v618 = vsel %vm603, %v611, %v615
  %v619 = vsel %vm604, %v613, %v616
  %623 = vrot.lane.b32.xlu0 %v617, 120
  %v624 = vpop.permute.xlu0 %623
  %625 = vrot.lane.b32.xlu0 %v618, 120
  %v626 = vpop.permute.xlu0 %625
  %627 = vrot.lane.b32.xlu0 %v619, 120
  %v628 = vpop.permute.xlu0 %627
  %632 = vst.msk [vmem:[%s10] sm:$0xff] %vm598, %v624
  %633 = vst.msk [vmem:[%s10 + $0x8] sm:$0xff] %vm598, %v626
  %634 = vst.msk [vmem:[%s10 + $0x10] sm:$0xff] %vm598, %v628
  // Predicated region
  $region38: #{split_diag_gaussian_decoder.1} parent=0 // pred_check
    _
  $region39: #{split_diag_gaussian_decoder.1} parent=0 // pred_check_branch
    %636 = sbr.rel (0) target = $region41
  $region40: #{split_diag_gaussian_decoder.1} parent=0 // pred_region
    _
  $region41: #{split_diag_gaussian_decoder.1} parent=0 // pred_fallthru
    _
  // Predicated region
  $region42: #{split_diag_gaussian_decoder.1} parent=0 // pred_check
    _
  $region43: #{split_diag_gaussian_decoder.1} parent=0 // pred_check_branch
    %638 = sbr.rel (0) target = $region45
  $region44: #{split_diag_gaussian_decoder.1} parent=0 // pred_region
    _
  $region45: #{split_diag_gaussian_decoder.1} parent=0 // pred_fallthru
    _
  // Predicated region
  $region46: #{split_diag_gaussian_decoder.1} parent=0 // pred_check
    _
  $region47: #{split_diag_gaussian_decoder.1} parent=0 // pred_check_branch
    %640 = sbr.rel (0) target = $region49
  $region48: #{split_diag_gaussian_decoder.1} parent=0 // pred_region
    _
  $region49: #{split_diag_gaussian_decoder.1} parent=0 // pred_fallthru
    _
  // Predicated region
  $region50: #{split_diag_gaussian_decoder.1} parent=0 // pred_check
    _
  $region51: #{split_diag_gaussian_decoder.1} parent=0 // pred_check_branch
    %642 = sbr.rel (0) target = $region53
  $region52: #{split_diag_gaussian_decoder.1} parent=0 // pred_region
    _
  $region53: #{split_diag_gaussian_decoder.1} parent=0 // pred_fallthru
    _

</llo_original>
